<compile_context>
chip_gen: v5e
topology: v5e:2x2
jax: 0.10.0
libtpu: 0.0.40
codegen_flags: <defaults>
</compile_context>

<pallas_src>
import jax
import jax.numpy as jnp
from jax.experimental import pallas as pl
from jax.experimental.pallas import tpu as pltpu


def _round_up(a, b):
    return ((a + b - 1) // b) * b


def _linear_kernel_f32_out(x_ref, wt_ref, b_ref, o_ref):
    """f32 output: accumulate directly into the output tile (no scratch)."""
    k = pl.program_id(2)

    @pl.when(k == 0)
    def _():
        o_ref[...] = jnp.zeros_like(o_ref)

    o_ref[...] += jnp.dot(
        x_ref[...], wt_ref[...], preferred_element_type=jnp.float32
    )

    @pl.when(k == pl.num_programs(2) - 1)
    def _():
        o_ref[...] = o_ref[...] + b_ref[...].astype(o_ref.dtype)


def _linear_kernel_scratch(x_ref, wt_ref, b_ref, o_ref, acc_ref):
    """Low-precision output: f32 scratch accumulator, cast once at the end."""
    k = pl.program_id(2)

    @pl.when(k == 0)
    def _():
        acc_ref[...] = jnp.zeros_like(acc_ref)

    acc_ref[...] += jnp.dot(
        x_ref[...], wt_ref[...], preferred_element_type=jnp.float32
    )

    @pl.when(k == pl.num_programs(2) - 1)
    def _():
        o_ref[...] = (acc_ref[...] + b_ref[...].astype(jnp.float32)).astype(
            o_ref.dtype
        )


def fast_linear(x, wt, bias=None, *, tm=None, tn=None, tk=None, out_dtype=None):
    """y = x @ wt + bias.

    x:    (..., K)
    wt:   (K, N)   -- weight already transposed (pre-transpose once, reuse)
    bias: (N,) or None
    """
    orig_shape = x.shape
    K = orig_shape[-1]
    Kw, N = wt.shape
    assert Kw == K, "weight / input feature mismatch"

    x2d = x.reshape(-1, K)
    M = x2d.shape[0]
    out_dtype = out_dtype or x.dtype

    # ---- tile selection: big tiles, clamped to (padded) problem size -------
    # 256-aligned tn/tm feed the 2x256x256 MXU on v6e/v7x; tm clamps down to
    # the (128-rounded) M for decode-style small batches; tk large to cut
    # accumulator init/finalize passes.
    if tm is None:
        tm = min(512, _round_up(M, 128))
    if tn is None:
        tn = min(512, _round_up(N, 128))
    if tk is None:
        tk = min(1024, _round_up(K, 128))

    # ---- pad to the tile grid (zeros in K contribute nothing) --------------
    Mp = _round_up(M, tm)
    Np = _round_up(N, tn)
    Kp = _round_up(K, tk)

    if (Mp, Kp) != (M, K):
        x2d = jnp.pad(x2d, ((0, Mp - M), (0, Kp - K)))
    wt_p = wt
    if (Kp, Np) != (K, N):
        wt_p = jnp.pad(wt, ((0, Kp - K), (0, Np - N)))
    if bias is None:
        b2d = jnp.zeros((1, Np), dtype=jnp.float32)
    else:
        b2d = jnp.pad(bias.reshape(1, N), ((0, 0), (0, Np - N)))

    grid = (pl.cdiv(Mp, tm), pl.cdiv(Np, tn), pl.cdiv(Kp, tk))

    in_specs = [
        pl.BlockSpec((tm, tk), lambda i, j, k: (i, k)),   # x tile
        pl.BlockSpec((tk, tn), lambda i, j, k: (k, j)),   # W^T tile
        pl.BlockSpec((1, tn), lambda i, j, k: (0, j)),    # bias tile
    ]
    out_specs = pl.BlockSpec((tm, tn), lambda i, j, k: (i, j))

    # f32 output: accumulate in-place in o_ref; otherwise keep f32 scratch.
    if out_dtype == jnp.float32:
        kernel = _linear_kernel_f32_out
        scratch_shapes = []
    else:
        kernel = _linear_kernel_scratch
        scratch_shapes = [pltpu.VMEM((tm, tn), jnp.float32)]

    itemsize = jnp.dtype(x.dtype).itemsize
    cost = pl.CostEstimate(
        flops=2 * M * N * K,
        transcendentals=0,
        bytes_accessed=(M * K + K * N + N) * itemsize
        + M * N * jnp.dtype(out_dtype).itemsize,
    )

    out = pl.pallas_call(
        kernel,
        out_shape=jax.ShapeDtypeStruct((Mp, Np), out_dtype),
        grid_spec=pltpu.PrefetchScalarGridSpec(
            num_scalar_prefetch=0,
            grid=grid,
            in_specs=in_specs,
            out_specs=out_specs,
            scratch_shapes=scratch_shapes,
        ),
        compiler_params=pltpu.CompilerParams(
            dimension_semantics=("parallel", "parallel", "arbitrary"),
        ),
        cost_estimate=cost,
    )(x2d, wt_p, b2d)

    out = out[:M, :N]
    return out.reshape(*orig_shape[:-1], N)


class SuperLayer:
    """JAX mirror of lorax SuperLayer: forwards x through the wrapped linear.

    The weight transpose is hoisted here (done once), so every forward call
    only pays the matmul + bias kernel.
    """

    def __init__(self, weight, bias=None):
        # weight: (out_features, in_features) -> stored pre-transposed (K, N)
        self.wt = jnp.asarray(weight).T
        self.bias = None if bias is None else jnp.asarray(bias)

    def __call__(self, x):
        return fast_linear(x, self.wt, self.bias)


if __name__ == "__main__":
    batch, seq, in_features, out_features = 2, 64, 256, 512

    key = jax.random.PRNGKey(0)
    kx, kw, kb = jax.random.split(key, 3)
    x = jax.random.normal(kx, (batch, seq, in_features), dtype=jnp.float32)
    weight = (
        jax.random.normal(kw, (out_features, in_features), dtype=jnp.float32) * 0.02
    )
    bias = jax.random.normal(kb, (out_features,), dtype=jnp.float32) * 0.02

    layer = SuperLayer(weight, bias)
    y = layer(x)
    jax.block_until_ready(y)

    # reference check in plain JAX
    y_ref = jnp.einsum("bsk,nk->bsn", x, weight) + bias
    assert y.shape == (batch, seq, out_features)
    assert jnp.allclose(y, y_ref, atol=1e-3, rtol=1e-3)

    # also exercise a non-tile-aligned (padded) shape path
    x_odd = jax.random.normal(kx, (3, 17, in_features), dtype=jnp.float32)
    y_odd = layer(x_odd)
    jax.block_until_ready(y_odd)
    y_odd_ref = jnp.einsum("bsk,nk->bsn", x_odd, weight) + bias
    assert jnp.allclose(y_odd, y_odd_ref, atol=1e-3, rtol=1e-3)

    print("KERNEL_OK")
</pallas_src>

<mosaic_0001>
module attributes {stable_mosaic.version = 11 : i64} {
  func.func @_linear_kernel_f32_out(%arg0: i32, %arg1: i32, %arg2: i32, %arg3: memref<128x256xf32, #tpu.memory_space<vmem>>, %arg4: memref<256x512xf32, #tpu.memory_space<vmem>>, %arg5: memref<1x512xf32, #tpu.memory_space<vmem>>, %arg6: memref<128x512xf32, #tpu.memory_space<vmem>>) attributes {dimension_semantics = [#tpu.dimension_semantics<parallel>, #tpu.dimension_semantics<parallel>, #tpu.dimension_semantics<arbitrary>], iteration_bounds = array<i64: 1, 1, 1>, scalar_prefetch = 0 : i64, scratch_operands = 0 : i64, tpu.core_type = #tpu.core_type<tc>, window_params = [{transform_indices = @transform_0, window_bounds = array<i64: 128, 256>}, {transform_indices = @transform_1, window_bounds = array<i64: 256, 512>}, {transform_indices = @transform_2, window_bounds = array<i64: 1, 512>}, {transform_indices = @transform_3, window_bounds = array<i64: 128, 512>}]} {
    %c0_i32 = arith.constant 0 : i32
    %0 = arith.cmpi eq, %arg2, %c0_i32 : i32
    %1 = arith.extui %0 : i1 to i32
    %c0_i32_0 = arith.constant 0 : i32
    %2 = arith.cmpi ne, %1, %c0_i32_0 : i32
    scf.if %2 {
      %cst_10 = arith.constant 0.000000e+00 : f32
      %12 = vector.broadcast %cst_10 : f32 to vector<128x512xf32>
      %c0_11 = arith.constant 0 : index
      %c0_12 = arith.constant 0 : index
      %13 = vector.load %arg6[%c0_11, %c0_12] : memref<128x512xf32, #tpu.memory_space<vmem>>, vector<128x512xf32>
      tpu.vector_store %arg6[%c0_11, %c0_12], %12 {strides = array<i32>} : memref<128x512xf32, #tpu.memory_space<vmem>>, vector<128x512xf32>,
    } else {
    }
    %c0 = arith.constant 0 : index
    %c0_1 = arith.constant 0 : index
    %3 = vector.load %arg6[%c0, %c0_1] : memref<128x512xf32, #tpu.memory_space<vmem>>, vector<128x512xf32>
    %c0_2 = arith.constant 0 : index
    %c0_3 = arith.constant 0 : index
    %4 = vector.load %arg3[%c0_2, %c0_3] : memref<128x256xf32, #tpu.memory_space<vmem>>, vector<128x256xf32>
    %c0_4 = arith.constant 0 : index
    %c0_5 = arith.constant 0 : index
    %5 = vector.load %arg4[%c0_4, %c0_5] : memref<256x512xf32, #tpu.memory_space<vmem>>, vector<256x512xf32>
    %cst = arith.constant dense<0.000000e+00> : vector<128x512xf32>
    %6 = tpu.matmul %4, %5, %cst {dimension_numbers = #tpu.dot_dimension_numbers<[1], [0], [0], [1], [0, 0, 1, 1], [], []>} : vector<128x256xf32>, vector<256x512xf32>, vector<128x512xf32> -> vector<128x512xf32>
    %7 = arith.addf %3, %6 : vector<128x512xf32>
    %c0_6 = arith.constant 0 : index
    %c0_7 = arith.constant 0 : index
    %8 = vector.load %arg6[%c0_6, %c0_7] : memref<128x512xf32, #tpu.memory_space<vmem>>, vector<128x512xf32>
    tpu.vector_store %arg6[%c0_6, %c0_7], %7 {strides = array<i32>} : memref<128x512xf32, #tpu.memory_space<vmem>>, vector<128x512xf32>,
    %c0_i32_8 = arith.constant 0 : i32
    %9 = arith.cmpi eq, %arg2, %c0_i32_8 : i32
    %10 = arith.extui %9 : i1 to i32
    %c0_i32_9 = arith.constant 0 : i32
    %11 = arith.cmpi ne, %10, %c0_i32_9 : i32
    scf.if %11 {
      %c0_10 = arith.constant 0 : index
      %c0_11 = arith.constant 0 : index
      %12 = vector.load %arg6[%c0_10, %c0_11] : memref<128x512xf32, #tpu.memory_space<vmem>>, vector<128x512xf32>
      %c0_12 = arith.constant 0 : index
      %c0_13 = arith.constant 0 : index
      %13 = vector.load %arg5[%c0_12, %c0_13] : memref<1x512xf32, #tpu.memory_space<vmem>>, vector<1x512xf32>
      %14 = vector.broadcast %13 : vector<1x512xf32> to vector<128x512xf32>
      %15 = arith.addf %12, %14 : vector<128x512xf32>
      %c0_14 = arith.constant 0 : index
      %c0_15 = arith.constant 0 : index
      %16 = vector.load %arg6[%c0_14, %c0_15] : memref<128x512xf32, #tpu.memory_space<vmem>>, vector<128x512xf32>
      tpu.vector_store %arg6[%c0_14, %c0_15], %15 {strides = array<i32>} : memref<128x512xf32, #tpu.memory_space<vmem>>, vector<128x512xf32>,
    } else {
    }
    return
  }
  func.func @transform_0(%arg0: i32, %arg1: i32, %arg2: i32) -> (i32, i32) {
    %c0_i32 = arith.constant 0 : i32
    return %arg0, %arg2 : i32, i32
  }
  func.func @transform_1(%arg0: i32, %arg1: i32, %arg2: i32) -> (i32, i32) {
    %c0_i32 = arith.constant 0 : i32
    return %arg2, %arg1 : i32, i32
  }
  func.func @transform_2(%arg0: i32, %arg1: i32, %arg2: i32) -> (i32, i32) {
    %c0_i32 = arith.constant 0 : i32
    %c0_i32_0 = arith.constant 0 : i32
    return %c0_i32, %arg1 : i32, i32
  }
  func.func @transform_3(%arg0: i32, %arg1: i32, %arg2: i32) -> (i32, i32) {
    %c0_i32 = arith.constant 0 : i32
    return %arg0, %arg1 : i32, i32
  }
}

</mosaic_0001>

<llo_original>
// kernel: tpu_custom_call.1
$region0: #{tpu_custom_call.1}
  #allocation0 [shape = 'u32[]', space=smem, size = 0x4, offset = 0x4, fixed_abs, tag = 'smem constant byte address 0x4 - core index']
  #allocation1 [shape = 'u32[72,128]{1,0:T(1,128)}', space=vmem, size = 0x9000, scoped, tag = 'internal scratch']
  %s0 = inlined_call_operand.hbm [shape: f32[128,256], index: 0, kind: input, shape index: {}]
  %s1 = inlined_call_operand.hbm [shape: f32[256,512], index: 1, kind: input, shape index: {}]
  %s2 = inlined_call_operand.hbm [shape: f32[1,512], index: 2, kind: input, shape index: {}]
  %s3 = inlined_call_operand.hbm [shape: f32[128,512], index: 3, kind: output, shape index: {}]
  %s4 = sld [smem:[#allocation0]]
  $region42: #{tpu_custom_call.1} parent=0
    _
  %s6 = ssub.s32 1, %s4
  %s7 = scalar_select 0, %s6, %s4
  $region1: #{tpu_custom_call.1} parent=0
    #allocation2 [shape = 'u8[131072]{0}', space=vmem, size = 0x20000, scoped, tag = 'input window, operand 0, single buffered']
    #allocation3 [shape = 's32[1]{0}', space=sflag, size = 0x4, scoped, tag = 'scoped memory for tpu_custom_call.1']
    #allocation4 [shape = 's32[1]{0}', space=sflag, size = 0x4, scoped, tag = 'scoped memory for tpu_custom_call.1']
    #allocation5 [shape = 'u8[524288]{0}', space=vmem, size = 0x80000, scoped, tag = 'input window, operand 1, single buffered']
    #allocation6 [shape = 's32[1]{0}', space=sflag, size = 0x4, scoped, tag = 'scoped memory for tpu_custom_call.1']
    #allocation7 [shape = 'u8[2048]{0}', space=vmem, size = 0x800, scoped, tag = 'input window, operand 2, single buffered']
    #allocation8 [shape = 'u8[262144]{0}', space=vmem, size = 0x40000, scoped, tag = 'output window, operand 0, single buffered']
    %8 = vsyncpa [#allocation3], 0
    %9 = vsyncpa [#allocation6], 0
    %10 = vsyncpa [#allocation4], 0
    // Predicated region
    $region2: #{tpu_custom_call.1} parent=1 // pred_check
      _
    $region3: #{tpu_custom_call.1} parent=1 // pred_check_branch
      %12 = sbr.rel (0) target = $region5
    $region4: #{tpu_custom_call.1} parent=1 // pred_region
      %14 = vsyncadd [#allocation3], 0
      %s15 = sshll.u32 %s0, 4
      %s16 = int_to_ptr.hbm [resolvable:$true] %s15
      %s17 = sshll.u32 [#allocation2], 4
      %s18 = int_to_ptr.vmem [resolvable:$true] %s17
      %23 = dma.hbm_to_vmem [thread:$0]  %s16, 4096, %s18, [#allocation3], 256, 256, 16
    $region5: #{tpu_custom_call.1} parent=1 // pred_fallthru
      _
    // Predicated region
    $region6: #{tpu_custom_call.1} parent=1 // pred_check
      _
    $region7: #{tpu_custom_call.1} parent=1 // pred_check_branch
      %25 = sbr.rel (0) target = $region9
    $region8: #{tpu_custom_call.1} parent=1 // pred_region
      %27 = vsyncadd [#allocation6], 0
      %s28 = sshll.u32 %s1, 4
      %s29 = int_to_ptr.hbm [resolvable:$true] %s28
      %s30 = sshll.u32 [#allocation5], 4
      %s31 = int_to_ptr.vmem [resolvable:$true] %s30
      %36 = dma.hbm_to_vmem [thread:$0]  %s29, 16384, %s31, [#allocation6], 512, 512, 32
    $region9: #{tpu_custom_call.1} parent=1 // pred_fallthru
      _
    // Predicated region
    $region10: #{tpu_custom_call.1} parent=1 // pred_check
      _
    $region11: #{tpu_custom_call.1} parent=1 // pred_check_branch
      %38 = sbr.rel (0) target = $region13
    $region12: #{tpu_custom_call.1} parent=1 // pred_region
      %40 = vsyncadd [#allocation6], 0
      %s42 = sshll.u32 %s2, 4
      %s43 = int_to_ptr.hbm [resolvable:$true] %s42
      %s44 = sshll.u32 [#allocation7], 4
      %s45 = int_to_ptr.vmem [resolvable:$true] %s44
      %47 = dma.hbm_to_vmem [thread:$0]  %s43, 64, %s45, [#allocation6]
    $region13: #{tpu_custom_call.1} parent=1 // pred_fallthru
      _
    // Predicated region
    $region14: #{tpu_custom_call.1} parent=1 // pred_check
      _
    $region15: #{tpu_custom_call.1} parent=1 // pred_check_branch
      %49 = sbr.rel (0) target = $region17
    $region16: #{tpu_custom_call.1} parent=1 // pred_region
      %51 = dma.done [#allocation3], 4096
    $region17: #{tpu_custom_call.1} parent=1 // pred_fallthru
      _
    // Predicated region
    $region18: #{tpu_custom_call.1} parent=1 // pred_check
      _
    $region19: #{tpu_custom_call.1} parent=1 // pred_check_branch
      %53 = sbr.rel (0) target = $region21
    $region20: #{tpu_custom_call.1} parent=1 // pred_region
      %55 = dma.done [#allocation6], 16384
    $region21: #{tpu_custom_call.1} parent=1 // pred_fallthru
      _
    // Predicated region
    $region22: #{tpu_custom_call.1} parent=1 // pred_check
      _
    $region23: #{tpu_custom_call.1} parent=1 // pred_check_branch
      %57 = sbr.rel (0) target = $region25
    $region24: #{tpu_custom_call.1} parent=1 // pred_region
      %59 = dma.done [#allocation6], 64
    $region25: #{tpu_custom_call.1} parent=1 // pred_fallthru
      _
    %p60 = scmp.eq.s32.totalorder 0, 0
    // Predicated region
    $region26: #{tpu_custom_call.1} parent=1 // pred_check
      %p61 = pneg %p60
    $region27: #{tpu_custom_call.1} parent=1 // pred_check_branch
      %63 = sbr.rel (%p61) target = $region29
    $region28: #{tpu_custom_call.1} parent=1 // pred_region
      %64 = vst [vmem:[#allocation8] sm:$0xff] 0.0
      %65 = vst [vmem:[#allocation8 + $0x8] sm:$0xff] 0.0
      %66 = vst [vmem:[#allocation8 + $0x10] sm:$0xff] 0.0
      %67 = vst [vmem:[#allocation8 + $0x18] sm:$0xff] 0.0
      %68 = vst [vmem:[#allocation8 + $0x20] sm:$0xff] 0.0
      %69 = vst [vmem:[#allocation8 + $0x28] sm:$0xff] 0.0
      %70 = vst [vmem:[#allocation8 + $0x30] sm:$0xff] 0.0
      %71 = vst [vmem:[#allocation8 + $0x38] sm:$0xff] 0.0
      %72 = vst [vmem:[#allocation8 + $0x40] sm:$0xff] 0.0
      %73 = vst [vmem:[#allocation8 + $0x48] sm:$0xff] 0.0
      %74 = vst [vmem:[#allocation8 + $0x50] sm:$0xff] 0.0
      %75 = vst [vmem:[#allocation8 + $0x58] sm:$0xff] 0.0
      %76 = vst [vmem:[#allocation8 + $0x60] sm:$0xff] 0.0
      %77 = vst [vmem:[#allocation8 + $0x68] sm:$0xff] 0.0
      %78 = vst [vmem:[#allocation8 + $0x70] sm:$0xff] 0.0
      %79 = vst [vmem:[#allocation8 + $0x78] sm:$0xff] 0.0
      %80 = vst [vmem:[#allocation8 + $0x80] sm:$0xff] 0.0
      %81 = vst [vmem:[#allocation8 + $0x88] sm:$0xff] 0.0
      %82 = vst [vmem:[#allocation8 + $0x90] sm:$0xff] 0.0
      %83 = vst [vmem:[#allocation8 + $0x98] sm:$0xff] 0.0
      %84 = vst [vmem:[#allocation8 + $0xa0] sm:$0xff] 0.0
      %85 = vst [vmem:[#allocation8 + $0xa8] sm:$0xff] 0.0
      %86 = vst [vmem:[#allocation8 + $0xb0] sm:$0xff] 0.0
      %87 = vst [vmem:[#allocation8 + $0xb8] sm:$0xff] 0.0
      %88 = vst [vmem:[#allocation8 + $0xc0] sm:$0xff] 0.0
      %89 = vst [vmem:[#allocation8 + $0xc8] sm:$0xff] 0.0
      %90 = vst [vmem:[#allocation8 + $0xd0] sm:$0xff] 0.0
      %91 = vst [vmem:[#allocation8 + $0xd8] sm:$0xff] 0.0
      %92 = vst [vmem:[#allocation8 + $0xe0] sm:$0xff] 0.0
      %93 = vst [vmem:[#allocation8 + $0xe8] sm:$0xff] 0.0
      %94 = vst [vmem:[#allocation8 + $0xf0] sm:$0xff] 0.0
      %95 = vst [vmem:[#allocation8 + $0xf8] sm:$0xff] 0.0
      %96 = vst [vmem:[#allocation8 + $0x100] sm:$0xff] 0.0
      %97 = vst [vmem:[#allocation8 + $0x108] sm:$0xff] 0.0
      %98 = vst [vmem:[#allocation8 + $0x110] sm:$0xff] 0.0
      %99 = vst [vmem:[#allocation8 + $0x118] sm:$0xff] 0.0
      %100 = vst [vmem:[#allocation8 + $0x120] sm:$0xff] 0.0
      %101 = vst [vmem:[#allocation8 + $0x128] sm:$0xff] 0.0
      %102 = vst [vmem:[#allocation8 + $0x130] sm:$0xff] 0.0
      %103 = vst [vmem:[#allocation8 + $0x138] sm:$0xff] 0.0
      %104 = vst [vmem:[#allocation8 + $0x140] sm:$0xff] 0.0
      %105 = vst [vmem:[#allocation8 + $0x148] sm:$0xff] 0.0
      %106 = vst [vmem:[#allocation8 + $0x150] sm:$0xff] 0.0
      %107 = vst [vmem:[#allocation8 + $0x158] sm:$0xff] 0.0
      %108 = vst [vmem:[#allocation8 + $0x160] sm:$0xff] 0.0
      %109 = vst [vmem:[#allocation8 + $0x168] sm:$0xff] 0.0
      %110 = vst [vmem:[#allocation8 + $0x170] sm:$0xff] 0.0
      %111 = vst [vmem:[#allocation8 + $0x178] sm:$0xff] 0.0
      %112 = vst [vmem:[#allocation8 + $0x180] sm:$0xff] 0.0
      %113 = vst [vmem:[#allocation8 + $0x188] sm:$0xff] 0.0
      %114 = vst [vmem:[#allocation8 + $0x190] sm:$0xff] 0.0
      %115 = vst [vmem:[#allocation8 + $0x198] sm:$0xff] 0.0
      %116 = vst [vmem:[#allocation8 + $0x1a0] sm:$0xff] 0.0
      %117 = vst [vmem:[#allocation8 + $0x1a8] sm:$0xff] 0.0
      %118 = vst [vmem:[#allocation8 + $0x1b0] sm:$0xff] 0.0
      %119 = vst [vmem:[#allocation8 + $0x1b8] sm:$0xff] 0.0
      %120 = vst [vmem:[#allocation8 + $0x1c0] sm:$0xff] 0.0
      %121 = vst [vmem:[#allocation8 + $0x1c8] sm:$0xff] 0.0
      %122 = vst [vmem:[#allocation8 + $0x1d0] sm:$0xff] 0.0
      %123 = vst [vmem:[#allocation8 + $0x1d8] sm:$0xff] 0.0
      %124 = vst [vmem:[#allocation8 + $0x1e0] sm:$0xff] 0.0
      %125 = vst [vmem:[#allocation8 + $0x1e8] sm:$0xff] 0.0
      %126 = vst [vmem:[#allocation8 + $0x1f0] sm:$0xff] 0.0
      %127 = vst [vmem:[#allocation8 + $0x1f8] sm:$0xff] 0.0
    $region29: #{tpu_custom_call.1} parent=1 // pred_fallthru
      _
    %v128 = vld [vmem:[#allocation8] sm:$0xff]
    %v129 = vld [vmem:[#allocation8 + $0x8] sm:$0xff]
    %v130 = vld [vmem:[#allocation8 + $0x10] sm:$0xff]
    %v131 = vld [vmem:[#allocation8 + $0x18] sm:$0xff]
    %v132 = vld [vmem:[#allocation8 + $0x20] sm:$0xff]
    %v133 = vld [vmem:[#allocation8 + $0x28] sm:$0xff]
    %v134 = vld [vmem:[#allocation8 + $0x30] sm:$0xff]
    %v135 = vld [vmem:[#allocation8 + $0x38] sm:$0xff]
    %v136 = vld [vmem:[#allocation8 + $0x40] sm:$0xff]
    %v137 = vld [vmem:[#allocation8 + $0x48] sm:$0xff]
    %v138 = vld [vmem:[#allocation8 + $0x50] sm:$0xff]
    %v139 = vld [vmem:[#allocation8 + $0x58] sm:$0xff]
    %v140 = vld [vmem:[#allocation8 + $0x60] sm:$0xff]
    %v141 = vld [vmem:[#allocation8 + $0x68] sm:$0xff]
    %v142 = vld [vmem:[#allocation8 + $0x70] sm:$0xff]
    %v143 = vld [vmem:[#allocation8 + $0x78] sm:$0xff]
    %v144 = vld [vmem:[#allocation8 + $0x80] sm:$0xff]
    %v145 = vld [vmem:[#allocation8 + $0x88] sm:$0xff]
    %v146 = vld [vmem:[#allocation8 + $0x90] sm:$0xff]
    %v147 = vld [vmem:[#allocation8 + $0x98] sm:$0xff]
    %v148 = vld [vmem:[#allocation8 + $0xa0] sm:$0xff]
    %v149 = vld [vmem:[#allocation8 + $0xa8] sm:$0xff]
    %v150 = vld [vmem:[#allocation8 + $0xb0] sm:$0xff]
    %v151 = vld [vmem:[#allocation8 + $0xb8] sm:$0xff]
    %v152 = vld [vmem:[#allocation8 + $0xc0] sm:$0xff]
    %v153 = vld [vmem:[#allocation8 + $0xc8] sm:$0xff]
    %v154 = vld [vmem:[#allocation8 + $0xd0] sm:$0xff]
    %v155 = vld [vmem:[#allocation8 + $0xd8] sm:$0xff]
    %v156 = vld [vmem:[#allocation8 + $0xe0] sm:$0xff]
    %v157 = vld [vmem:[#allocation8 + $0xe8] sm:$0xff]
    %v158 = vld [vmem:[#allocation8 + $0xf0] sm:$0xff]
    %v159 = vld [vmem:[#allocation8 + $0xf8] sm:$0xff]
    %v160 = vld [vmem:[#allocation8 + $0x100] sm:$0xff]
    %v161 = vld [vmem:[#allocation8 + $0x108] sm:$0xff]
    %v162 = vld [vmem:[#allocation8 + $0x110] sm:$0xff]
    %v163 = vld [vmem:[#allocation8 + $0x118] sm:$0xff]
    %v164 = vld [vmem:[#allocation8 + $0x120] sm:$0xff]
    %v165 = vld [vmem:[#allocation8 + $0x128] sm:$0xff]
    %v166 = vld [vmem:[#allocation8 + $0x130] sm:$0xff]
    %v167 = vld [vmem:[#allocation8 + $0x138] sm:$0xff]
    %v168 = vld [vmem:[#allocation8 + $0x140] sm:$0xff]
    %v169 = vld [vmem:[#allocation8 + $0x148] sm:$0xff]
    %v170 = vld [vmem:[#allocation8 + $0x150] sm:$0xff]
    %v171 = vld [vmem:[#allocation8 + $0x158] sm:$0xff]
    %v172 = vld [vmem:[#allocation8 + $0x160] sm:$0xff]
    %v173 = vld [vmem:[#allocation8 + $0x168] sm:$0xff]
    %v174 = vld [vmem:[#allocation8 + $0x170] sm:$0xff]
    %v175 = vld [vmem:[#allocation8 + $0x178] sm:$0xff]
    %v176 = vld [vmem:[#allocation8 + $0x180] sm:$0xff]
    %v177 = vld [vmem:[#allocation8 + $0x188] sm:$0xff]
    %v178 = vld [vmem:[#allocation8 + $0x190] sm:$0xff]
    %v179 = vld [vmem:[#allocation8 + $0x198] sm:$0xff]
    %v180 = vld [vmem:[#allocation8 + $0x1a0] sm:$0xff]
    %v181 = vld [vmem:[#allocation8 + $0x1a8] sm:$0xff]
    %v182 = vld [vmem:[#allocation8 + $0x1b0] sm:$0xff]
    %v183 = vld [vmem:[#allocation8 + $0x1b8] sm:$0xff]
    %v184 = vld [vmem:[#allocation8 + $0x1c0] sm:$0xff]
    %v185 = vld [vmem:[#allocation8 + $0x1c8] sm:$0xff]
    %v186 = vld [vmem:[#allocation8 + $0x1d0] sm:$0xff]
    %v187 = vld [vmem:[#allocation8 + $0x1d8] sm:$0xff]
    %v188 = vld [vmem:[#allocation8 + $0x1e0] sm:$0xff]
    %v189 = vld [vmem:[#allocation8 + $0x1e8] sm:$0xff]
    %v190 = vld [vmem:[#allocation8 + $0x1f0] sm:$0xff]
    %v191 = vld [vmem:[#allocation8 + $0x1f8] sm:$0xff]
    %v192 = vld [vmem:[#allocation2] sm:$0xff]
    %v193 = vld [vmem:[#allocation2 + $0x8] sm:$0xff]
    %v194 = vld [vmem:[#allocation2 + $0x10] sm:$0xff]
    %v195 = vld [vmem:[#allocation2 + $0x18] sm:$0xff]
    %v196 = vld [vmem:[#allocation2 + $0x20] sm:$0xff]
    %v197 = vld [vmem:[#allocation2 + $0x28] sm:$0xff]
    %v198 = vld [vmem:[#allocation2 + $0x30] sm:$0xff]
    %v199 = vld [vmem:[#allocation2 + $0x38] sm:$0xff]
    %v200 = vld [vmem:[#allocation2 + $0x40] sm:$0xff]
    %v201 = vld [vmem:[#allocation2 + $0x48] sm:$0xff]
    %v202 = vld [vmem:[#allocation2 + $0x50] sm:$0xff]
    %v203 = vld [vmem:[#allocation2 + $0x58] sm:$0xff]
    %v204 = vld [vmem:[#allocation2 + $0x60] sm:$0xff]
    %v205 = vld [vmem:[#allocation2 + $0x68] sm:$0xff]
    %v206 = vld [vmem:[#allocation2 + $0x70] sm:$0xff]
    %v207 = vld [vmem:[#allocation2 + $0x78] sm:$0xff]
    %v208 = vld [vmem:[#allocation2 + $0x80] sm:$0xff]
    %v209 = vld [vmem:[#allocation2 + $0x88] sm:$0xff]
    %v210 = vld [vmem:[#allocation2 + $0x90] sm:$0xff]
    %v211 = vld [vmem:[#allocation2 + $0x98] sm:$0xff]
    %v212 = vld [vmem:[#allocation2 + $0xa0] sm:$0xff]
    %v213 = vld [vmem:[#allocation2 + $0xa8] sm:$0xff]
    %v214 = vld [vmem:[#allocation2 + $0xb0] sm:$0xff]
    %v215 = vld [vmem:[#allocation2 + $0xb8] sm:$0xff]
    %v216 = vld [vmem:[#allocation2 + $0xc0] sm:$0xff]
    %v217 = vld [vmem:[#allocation2 + $0xc8] sm:$0xff]
    %v218 = vld [vmem:[#allocation2 + $0xd0] sm:$0xff]
    %v219 = vld [vmem:[#allocation2 + $0xd8] sm:$0xff]
    %v220 = vld [vmem:[#allocation2 + $0xe0] sm:$0xff]
    %v221 = vld [vmem:[#allocation2 + $0xe8] sm:$0xff]
    %v222 = vld [vmem:[#allocation2 + $0xf0] sm:$0xff]
    %v223 = vld [vmem:[#allocation2 + $0xf8] sm:$0xff]
    %v224 = vld [vmem:[#allocation5] sm:$0xff]
    %v225 = vld [vmem:[#allocation5 + $0x8] sm:$0xff]
    %v226 = vld [vmem:[#allocation5 + $0x10] sm:$0xff]
    %v227 = vld [vmem:[#allocation5 + $0x18] sm:$0xff]
    %v228 = vld [vmem:[#allocation5 + $0x20] sm:$0xff]
    %v229 = vld [vmem:[#allocation5 + $0x28] sm:$0xff]
    %v230 = vld [vmem:[#allocation5 + $0x30] sm:$0xff]
    %v231 = vld [vmem:[#allocation5 + $0x38] sm:$0xff]
    %v232 = vld [vmem:[#allocation5 + $0x40] sm:$0xff]
    %v233 = vld [vmem:[#allocation5 + $0x48] sm:$0xff]
    %v234 = vld [vmem:[#allocation5 + $0x50] sm:$0xff]
    %v235 = vld [vmem:[#allocation5 + $0x58] sm:$0xff]
    %v236 = vld [vmem:[#allocation5 + $0x60] sm:$0xff]
    %v237 = vld [vmem:[#allocation5 + $0x68] sm:$0xff]
    %v238 = vld [vmem:[#allocation5 + $0x70] sm:$0xff]
    %v239 = vld [vmem:[#allocation5 + $0x78] sm:$0xff]
    %v240 = vld [vmem:[#allocation5 + $0x80] sm:$0xff]
    %v241 = vld [vmem:[#allocation5 + $0x88] sm:$0xff]
    %v242 = vld [vmem:[#allocation5 + $0x90] sm:$0xff]
    %v243 = vld [vmem:[#allocation5 + $0x98] sm:$0xff]
    %v244 = vld [vmem:[#allocation5 + $0xa0] sm:$0xff]
    %v245 = vld [vmem:[#allocation5 + $0xa8] sm:$0xff]
    %v246 = vld [vmem:[#allocation5 + $0xb0] sm:$0xff]
    %v247 = vld [vmem:[#allocation5 + $0xb8] sm:$0xff]
    %v248 = vld [vmem:[#allocation5 + $0xc0] sm:$0xff]
    %v249 = vld [vmem:[#allocation5 + $0xc8] sm:$0xff]
    %v250 = vld [vmem:[#allocation5 + $0xd0] sm:$0xff]
    %v251 = vld [vmem:[#allocation5 + $0xd8] sm:$0xff]
    %v252 = vld [vmem:[#allocation5 + $0xe0] sm:$0xff]
    %v253 = vld [vmem:[#allocation5 + $0xe8] sm:$0xff]
    %v254 = vld [vmem:[#allocation5 + $0xf0] sm:$0xff]
    %v255 = vld [vmem:[#allocation5 + $0xf8] sm:$0xff]
    %v256 = vld [vmem:[#allocation5 + $0x100] sm:$0xff]
    %v257 = vld [vmem:[#allocation5 + $0x108] sm:$0xff]
    %v258 = vld [vmem:[#allocation5 + $0x110] sm:$0xff]
    %v259 = vld [vmem:[#allocation5 + $0x118] sm:$0xff]
    %v260 = vld [vmem:[#allocation5 + $0x120] sm:$0xff]
    %v261 = vld [vmem:[#allocation5 + $0x128] sm:$0xff]
    %v262 = vld [vmem:[#allocation5 + $0x130] sm:$0xff]
    %v263 = vld [vmem:[#allocation5 + $0x138] sm:$0xff]
    %v264 = vld [vmem:[#allocation5 + $0x140] sm:$0xff]
    %v265 = vld [vmem:[#allocation5 + $0x148] sm:$0xff]
    %v266 = vld [vmem:[#allocation5 + $0x150] sm:$0xff]
    %v267 = vld [vmem:[#allocation5 + $0x158] sm:$0xff]
    %v268 = vld [vmem:[#allocation5 + $0x160] sm:$0xff]
    %v269 = vld [vmem:[#allocation5 + $0x168] sm:$0xff]
    %v270 = vld [vmem:[#allocation5 + $0x170] sm:$0xff]
    %v271 = vld [vmem:[#allocation5 + $0x178] sm:$0xff]
    %v272 = vld [vmem:[#allocation5 + $0x180] sm:$0xff]
    %v273 = vld [vmem:[#allocation5 + $0x188] sm:$0xff]
    %v274 = vld [vmem:[#allocation5 + $0x190] sm:$0xff]
    %v275 = vld [vmem:[#allocation5 + $0x198] sm:$0xff]
    %v276 = vld [vmem:[#allocation5 + $0x1a0] sm:$0xff]
    %v277 = vld [vmem:[#allocation5 + $0x1a8] sm:$0xff]
    %v278 = vld [vmem:[#allocation5 + $0x1b0] sm:$0xff]
    %v279 = vld [vmem:[#allocation5 + $0x1b8] sm:$0xff]
    %v280 = vld [vmem:[#allocation5 + $0x1c0] sm:$0xff]
    %v281 = vld [vmem:[#allocation5 + $0x1c8] sm:$0xff]
    %v282 = vld [vmem:[#allocation5 + $0x1d0] sm:$0xff]
    %v283 = vld [vmem:[#allocation5 + $0x1d8] sm:$0xff]
    %v284 = vld [vmem:[#allocation5 + $0x1e0] sm:$0xff]
    %v285 = vld [vmem:[#allocation5 + $0x1e8] sm:$0xff]
    %v286 = vld [vmem:[#allocation5 + $0x1f0] sm:$0xff]
    %v287 = vld [vmem:[#allocation5 + $0x1f8] sm:$0xff]
    %v288 = vld [vmem:[#allocation5 + $0x200] sm:$0xff]
    %v289 = vld [vmem:[#allocation5 + $0x208] sm:$0xff]
    %v290 = vld [vmem:[#allocation5 + $0x210] sm:$0xff]
    %v291 = vld [vmem:[#allocation5 + $0x218] sm:$0xff]
    %v292 = vld [vmem:[#allocation5 + $0x220] sm:$0xff]
    %v293 = vld [vmem:[#allocation5 + $0x228] sm:$0xff]
    %v294 = vld [vmem:[#allocation5 + $0x230] sm:$0xff]
    %v295 = vld [vmem:[#allocation5 + $0x238] sm:$0xff]
    %v296 = vld [vmem:[#allocation5 + $0x240] sm:$0xff]
    %v297 = vld [vmem:[#allocation5 + $0x248] sm:$0xff]
    %v298 = vld [vmem:[#allocation5 + $0x250] sm:$0xff]
    %v299 = vld [vmem:[#allocation5 + $0x258] sm:$0xff]
    %v300 = vld [vmem:[#allocation5 + $0x260] sm:$0xff]
    %v301 = vld [vmem:[#allocation5 + $0x268] sm:$0xff]
    %v302 = vld [vmem:[#allocation5 + $0x270] sm:$0xff]
    %v303 = vld [vmem:[#allocation5 + $0x278] sm:$0xff]
    %v304 = vld [vmem:[#allocation5 + $0x280] sm:$0xff]
    %v305 = vld [vmem:[#allocation5 + $0x288] sm:$0xff]
    %v306 = vld [vmem:[#allocation5 + $0x290] sm:$0xff]
    %v307 = vld [vmem:[#allocation5 + $0x298] sm:$0xff]
    %v308 = vld [vmem:[#allocation5 + $0x2a0] sm:$0xff]
    %v309 = vld [vmem:[#allocation5 + $0x2a8] sm:$0xff]
    %v310 = vld [vmem:[#allocation5 + $0x2b0] sm:$0xff]
    %v311 = vld [vmem:[#allocation5 + $0x2b8] sm:$0xff]
    %v312 = vld [vmem:[#allocation5 + $0x2c0] sm:$0xff]
    %v313 = vld [vmem:[#allocation5 + $0x2c8] sm:$0xff]
    %v314 = vld [vmem:[#allocation5 + $0x2d0] sm:$0xff]
    %v315 = vld [vmem:[#allocation5 + $0x2d8] sm:$0xff]
    %v316 = vld [vmem:[#allocation5 + $0x2e0] sm:$0xff]
    %v317 = vld [vmem:[#allocation5 + $0x2e8] sm:$0xff]
    %v318 = vld [vmem:[#allocation5 + $0x2f0] sm:$0xff]
    %v319 = vld [vmem:[#allocation5 + $0x2f8] sm:$0xff]
    %v320 = vld [vmem:[#allocation5 + $0x300] sm:$0xff]
    %v321 = vld [vmem:[#allocation5 + $0x308] sm:$0xff]
    %v322 = vld [vmem:[#allocation5 + $0x310] sm:$0xff]
    %v323 = vld [vmem:[#allocation5 + $0x318] sm:$0xff]
    %v324 = vld [vmem:[#allocation5 + $0x320] sm:$0xff]
    %v325 = vld [vmem:[#allocation5 + $0x328] sm:$0xff]
    %v326 = vld [vmem:[#allocation5 + $0x330] sm:$0xff]
    %v327 = vld [vmem:[#allocation5 + $0x338] sm:$0xff]
    %v328 = vld [vmem:[#allocation5 + $0x340] sm:$0xff]
    %v329 = vld [vmem:[#allocation5 + $0x348] sm:$0xff]
    %v330 = vld [vmem:[#allocation5 + $0x350] sm:$0xff]
    %v331 = vld [vmem:[#allocation5 + $0x358] sm:$0xff]
    %v332 = vld [vmem:[#allocation5 + $0x360] sm:$0xff]
    %v333 = vld [vmem:[#allocation5 + $0x368] sm:$0xff]
    %v334 = vld [vmem:[#allocation5 + $0x370] sm:$0xff]
    %v335 = vld [vmem:[#allocation5 + $0x378] sm:$0xff]
    %v336 = vld [vmem:[#allocation5 + $0x380] sm:$0xff]
    %v337 = vld [vmem:[#allocation5 + $0x388] sm:$0xff]
    %v338 = vld [vmem:[#allocation5 + $0x390] sm:$0xff]
    %v339 = vld [vmem:[#allocation5 + $0x398] sm:$0xff]
    %v340 = vld [vmem:[#allocation5 + $0x3a0] sm:$0xff]
    %v341 = vld [vmem:[#allocation5 + $0x3a8] sm:$0xff]
    %v342 = vld [vmem:[#allocation5 + $0x3b0] sm:$0xff]
    %v343 = vld [vmem:[#allocation5 + $0x3b8] sm:$0xff]
    %v344 = vld [vmem:[#allocation5 + $0x3c0] sm:$0xff]
    %v345 = vld [vmem:[#allocation5 + $0x3c8] sm:$0xff]
    %v346 = vld [vmem:[#allocation5 + $0x3d0] sm:$0xff]
    %v347 = vld [vmem:[#allocation5 + $0x3d8] sm:$0xff]
    %v348 = vld [vmem:[#allocation5 + $0x3e0] sm:$0xff]
    %v349 = vld [vmem:[#allocation5 + $0x3e8] sm:$0xff]
    %v350 = vld [vmem:[#allocation5 + $0x3f0] sm:$0xff]
    %v351 = vld [vmem:[#allocation5 + $0x3f8] sm:$0xff]
    %352 = vmatpush.msra.mxu0 %v284
    %353 = vmatpush.msra.mxu0 %v280
    %354 = vmatpush.msra.mxu0 %v276
    %355 = vmatpush.msra.mxu0 %v272
    %356 = vmatpush.msra.mxu0 %v268
    %357 = vmatpush.msra.mxu0 %v264
    %358 = vmatpush.msra.mxu0 %v260
    %359 = vmatpush.msra.mxu0 %v256
    %360 = vmatpush.msra.mxu0 %v252
    %361 = vmatpush.msra.mxu0 %v248
    %362 = vmatpush.msra.mxu0 %v244
    %363 = vmatpush.msra.mxu0 %v240
    %364 = vmatpush.msra.mxu0 %v236
    %365 = vmatpush.msra.mxu0 %v232
    %366 = vmatpush.msra.mxu0 %v228
    %367 = vmatpush.msra.mxu0 %v224
    %368 = vmatmul.f32.gmra.mxu0 %v192
    %v369 = vpop.f32.mrf.mxu0
    %v370 = vadd.f32 0.0, %v369
    %371 = vmatmul.f32.gmra.mxu0 %v194
    %v372 = vpop.f32.mrf.mxu0
    %v373 = vadd.f32 0.0, %v372
    %374 = vmatmul.f32.gmra.mxu0 %v196
    %v375 = vpop.f32.mrf.mxu0
    %v376 = vadd.f32 0.0, %v375
    %377 = vmatmul.f32.gmra.mxu0 %v198
    %v378 = vpop.f32.mrf.mxu0
    %v379 = vadd.f32 0.0, %v378
    %380 = vmatmul.f32.gmra.mxu0 %v200
    %v381 = vpop.f32.mrf.mxu0
    %v382 = vadd.f32 0.0, %v381
    %383 = vmatmul.f32.gmra.mxu0 %v202
    %v384 = vpop.f32.mrf.mxu0
    %v385 = vadd.f32 0.0, %v384
    %386 = vmatmul.f32.gmra.mxu0 %v204
    %v387 = vpop.f32.mrf.mxu0
    %v388 = vadd.f32 0.0, %v387
    %389 = vmatmul.f32.gmra.mxu0 %v206
    %v390 = vpop.f32.mrf.mxu0
    %v391 = vadd.f32 0.0, %v390
    %392 = vmatmul.f32.gmra.mxu0 %v208
    %v393 = vpop.f32.mrf.mxu0
    %v394 = vadd.f32 0.0, %v393
    %395 = vmatmul.f32.gmra.mxu0 %v210
    %v396 = vpop.f32.mrf.mxu0
    %v397 = vadd.f32 0.0, %v396
    %398 = vmatmul.f32.gmra.mxu0 %v212
    %v399 = vpop.f32.mrf.mxu0
    %v400 = vadd.f32 0.0, %v399
    %401 = vmatmul.f32.gmra.mxu0 %v214
    %v402 = vpop.f32.mrf.mxu0
    %v403 = vadd.f32 0.0, %v402
    %404 = vmatmul.f32.gmra.mxu0 %v216
    %v405 = vpop.f32.mrf.mxu0
    %v406 = vadd.f32 0.0, %v405
    %407 = vmatmul.f32.gmra.mxu0 %v218
    %v408 = vpop.f32.mrf.mxu0
    %v409 = vadd.f32 0.0, %v408
    %410 = vmatmul.f32.gmra.mxu0 %v220
    %v411 = vpop.f32.mrf.mxu0
    %v412 = vadd.f32 0.0, %v411
    %413 = vmatmul.f32.gmra.mxu0 %v222
    %v414 = vpop.f32.mrf.mxu0
    %v415 = vadd.f32 0.0, %v414
    %416 = vdwg.mxu0
    %417 = vmatpush.msra.mxu0 %v348
    %418 = vmatpush.msra.mxu0 %v344
    %419 = vmatpush.msra.mxu0 %v340
    %420 = vmatpush.msra.mxu0 %v336
    %421 = vmatpush.msra.mxu0 %v332
    %422 = vmatpush.msra.mxu0 %v328
    %423 = vmatpush.msra.mxu0 %v324
    %424 = vmatpush.msra.mxu0 %v320
    %425 = vmatpush.msra.mxu0 %v316
    %426 = vmatpush.msra.mxu0 %v312
    %427 = vmatpush.msra.mxu0 %v308
    %428 = vmatpush.msra.mxu0 %v304
    %429 = vmatpush.msra.mxu0 %v300
    %430 = vmatpush.msra.mxu0 %v296
    %431 = vmatpush.msra.mxu0 %v292
    %432 = vmatpush.msra.mxu0 %v288
    %433 = vmatmul.f32.gmra.mxu0 %v193
    %v434 = vpop.f32.mrf.mxu0
    %v435 = vadd.f32 %v370, %v434
    %436 = vmatmul.f32.gmra.mxu0 %v195
    %v437 = vpop.f32.mrf.mxu0
    %v438 = vadd.f32 %v373, %v437
    %439 = vmatmul.f32.gmra.mxu0 %v197
    %v440 = vpop.f32.mrf.mxu0
    %v441 = vadd.f32 %v376, %v440
    %442 = vmatmul.f32.gmra.mxu0 %v199
    %v443 = vpop.f32.mrf.mxu0
    %v444 = vadd.f32 %v379, %v443
    %445 = vmatmul.f32.gmra.mxu0 %v201
    %v446 = vpop.f32.mrf.mxu0
    %v447 = vadd.f32 %v382, %v446
    %448 = vmatmul.f32.gmra.mxu0 %v203
    %v449 = vpop.f32.mrf.mxu0
    %v450 = vadd.f32 %v385, %v449
    %451 = vmatmul.f32.gmra.mxu0 %v205
    %v452 = vpop.f32.mrf.mxu0
    %v453 = vadd.f32 %v388, %v452
    %454 = vmatmul.f32.gmra.mxu0 %v207
    %v455 = vpop.f32.mrf.mxu0
    %v456 = vadd.f32 %v391, %v455
    %457 = vmatmul.f32.gmra.mxu0 %v209
    %v458 = vpop.f32.mrf.mxu0
    %v459 = vadd.f32 %v394, %v458
    %460 = vmatmul.f32.gmra.mxu0 %v211
    %v461 = vpop.f32.mrf.mxu0
    %v462 = vadd.f32 %v397, %v461
    %463 = vmatmul.f32.gmra.mxu0 %v213
    %v464 = vpop.f32.mrf.mxu0
    %v465 = vadd.f32 %v400, %v464
    %466 = vmatmul.f32.gmra.mxu0 %v215
    %v467 = vpop.f32.mrf.mxu0
    %v468 = vadd.f32 %v403, %v467
    %469 = vmatmul.f32.gmra.mxu0 %v217
    %v470 = vpop.f32.mrf.mxu0
    %v471 = vadd.f32 %v406, %v470
    %472 = vmatmul.f32.gmra.mxu0 %v219
    %v473 = vpop.f32.mrf.mxu0
    %v474 = vadd.f32 %v409, %v473
    %475 = vmatmul.f32.gmra.mxu0 %v221
    %v476 = vpop.f32.mrf.mxu0
    %v477 = vadd.f32 %v412, %v476
    %478 = vmatmul.f32.gmra.mxu0 %v223
    %v479 = vpop.f32.mrf.mxu0
    %v480 = vadd.f32 %v415, %v479
    %481 = vdwg.mxu0
    %482 = vmatpush.msra.mxu0 %v285
    %483 = vmatpush.msra.mxu0 %v281
    %484 = vmatpush.msra.mxu0 %v277
    %485 = vmatpush.msra.mxu0 %v273
    %486 = vmatpush.msra.mxu0 %v269
    %487 = vmatpush.msra.mxu0 %v265
    %488 = vmatpush.msra.mxu0 %v261
    %489 = vmatpush.msra.mxu0 %v257
    %490 = vmatpush.msra.mxu0 %v253
    %491 = vmatpush.msra.mxu0 %v249
    %492 = vmatpush.msra.mxu0 %v245
    %493 = vmatpush.msra.mxu0 %v241
    %494 = vmatpush.msra.mxu0 %v237
    %495 = vmatpush.msra.mxu0 %v233
    %496 = vmatpush.msra.mxu0 %v229
    %497 = vmatpush.msra.mxu0 %v225
    %498 = vmatmul.f32.gmra.mxu0 %v192
    %v499 = vpop.f32.mrf.mxu0
    %v500 = vadd.f32 0.0, %v499
    %501 = vmatmul.f32.gmra.mxu0 %v194
    %v502 = vpop.f32.mrf.mxu0
    %v503 = vadd.f32 0.0, %v502
    %504 = vmatmul.f32.gmra.mxu0 %v196
    %v505 = vpop.f32.mrf.mxu0
    %v506 = vadd.f32 0.0, %v505
    %507 = vmatmul.f32.gmra.mxu0 %v198
    %v508 = vpop.f32.mrf.mxu0
    %v509 = vadd.f32 0.0, %v508
    %510 = vmatmul.f32.gmra.mxu0 %v200
    %v511 = vpop.f32.mrf.mxu0
    %v512 = vadd.f32 0.0, %v511
    %513 = vmatmul.f32.gmra.mxu0 %v202
    %v514 = vpop.f32.mrf.mxu0
    %v515 = vadd.f32 0.0, %v514
    %516 = vmatmul.f32.gmra.mxu0 %v204
    %v517 = vpop.f32.mrf.mxu0
    %v518 = vadd.f32 0.0, %v517
    %519 = vmatmul.f32.gmra.mxu0 %v206
    %v520 = vpop.f32.mrf.mxu0
    %v521 = vadd.f32 0.0, %v520
    %522 = vmatmul.f32.gmra.mxu0 %v208
    %v523 = vpop.f32.mrf.mxu0
    %v524 = vadd.f32 0.0, %v523
    %525 = vmatmul.f32.gmra.mxu0 %v210
    %v526 = vpop.f32.mrf.mxu0
    %v527 = vadd.f32 0.0, %v526
    %528 = vmatmul.f32.gmra.mxu0 %v212
    %v529 = vpop.f32.mrf.mxu0
    %v530 = vadd.f32 0.0, %v529
    %531 = vmatmul.f32.gmra.mxu0 %v214
    %v532 = vpop.f32.mrf.mxu0
    %v533 = vadd.f32 0.0, %v532
    %534 = vmatmul.f32.gmra.mxu0 %v216
    %v535 = vpop.f32.mrf.mxu0
    %v536 = vadd.f32 0.0, %v535
    %537 = vmatmul.f32.gmra.mxu0 %v218
    %v538 = vpop.f32.mrf.mxu0
    %v539 = vadd.f32 0.0, %v538
    %540 = vmatmul.f32.gmra.mxu0 %v220
    %v541 = vpop.f32.mrf.mxu0
    %v542 = vadd.f32 0.0, %v541
    %543 = vmatmul.f32.gmra.mxu0 %v222
    %v544 = vpop.f32.mrf.mxu0
    %v545 = vadd.f32 0.0, %v544
    %546 = vdwg.mxu0
    %547 = vmatpush.msra.mxu0 %v349
    %548 = vmatpush.msra.mxu0 %v345
    %549 = vmatpush.msra.mxu0 %v341
    %550 = vmatpush.msra.mxu0 %v337
    %551 = vmatpush.msra.mxu0 %v333
    %552 = vmatpush.msra.mxu0 %v329
    %553 = vmatpush.msra.mxu0 %v325
    %554 = vmatpush.msra.mxu0 %v321
    %555 = vmatpush.msra.mxu0 %v317
    %556 = vmatpush.msra.mxu0 %v313
    %557 = vmatpush.msra.mxu0 %v309
    %558 = vmatpush.msra.mxu0 %v305
    %559 = vmatpush.msra.mxu0 %v301
    %560 = vmatpush.msra.mxu0 %v297
    %561 = vmatpush.msra.mxu0 %v293
    %562 = vmatpush.msra.mxu0 %v289
    %563 = vmatmul.f32.gmra.mxu0 %v193
    %v564 = vpop.f32.mrf.mxu0
    %v565 = vadd.f32 %v500, %v564
    %566 = vmatmul.f32.gmra.mxu0 %v195
    %v567 = vpop.f32.mrf.mxu0
    %v568 = vadd.f32 %v503, %v567
    %569 = vmatmul.f32.gmra.mxu0 %v197
    %v570 = vpop.f32.mrf.mxu0
    %v571 = vadd.f32 %v506, %v570
    %572 = vmatmul.f32.gmra.mxu0 %v199
    %v573 = vpop.f32.mrf.mxu0
    %v574 = vadd.f32 %v509, %v573
    %575 = vmatmul.f32.gmra.mxu0 %v201
    %v576 = vpop.f32.mrf.mxu0
    %v577 = vadd.f32 %v512, %v576
    %578 = vmatmul.f32.gmra.mxu0 %v203
    %v579 = vpop.f32.mrf.mxu0
    %v580 = vadd.f32 %v515, %v579
    %581 = vmatmul.f32.gmra.mxu0 %v205
    %v582 = vpop.f32.mrf.mxu0
    %v583 = vadd.f32 %v518, %v582
    %584 = vmatmul.f32.gmra.mxu0 %v207
    %v585 = vpop.f32.mrf.mxu0
    %v586 = vadd.f32 %v521, %v585
    %587 = vmatmul.f32.gmra.mxu0 %v209
    %v588 = vpop.f32.mrf.mxu0
    %v589 = vadd.f32 %v524, %v588
    %590 = vmatmul.f32.gmra.mxu0 %v211
    %v591 = vpop.f32.mrf.mxu0
    %v592 = vadd.f32 %v527, %v591
    %593 = vmatmul.f32.gmra.mxu0 %v213
    %v594 = vpop.f32.mrf.mxu0
    %v595 = vadd.f32 %v530, %v594
    %596 = vmatmul.f32.gmra.mxu0 %v215
    %v597 = vpop.f32.mrf.mxu0
    %v598 = vadd.f32 %v533, %v597
    %599 = vmatmul.f32.gmra.mxu0 %v217
    %v600 = vpop.f32.mrf.mxu0
    %v601 = vadd.f32 %v536, %v600
    %602 = vmatmul.f32.gmra.mxu0 %v219
    %v603 = vpop.f32.mrf.mxu0
    %v604 = vadd.f32 %v539, %v603
    %605 = vmatmul.f32.gmra.mxu0 %v221
    %v606 = vpop.f32.mrf.mxu0
    %v607 = vadd.f32 %v542, %v606
    %608 = vmatmul.f32.gmra.mxu0 %v223
    %v609 = vpop.f32.mrf.mxu0
    %v610 = vadd.f32 %v545, %v609
    %611 = vdwg.mxu0
    %612 = vmatpush.msra.mxu0 %v286
    %613 = vmatpush.msra.mxu0 %v282
    %614 = vmatpush.msra.mxu0 %v278
    %615 = vmatpush.msra.mxu0 %v274
    %616 = vmatpush.msra.mxu0 %v270
    %617 = vmatpush.msra.mxu0 %v266
    %618 = vmatpush.msra.mxu0 %v262
    %619 = vmatpush.msra.mxu0 %v258
    %620 = vmatpush.msra.mxu0 %v254
    %621 = vmatpush.msra.mxu0 %v250
    %622 = vmatpush.msra.mxu0 %v246
    %623 = vmatpush.msra.mxu0 %v242
    %624 = vmatpush.msra.mxu0 %v238
    %625 = vmatpush.msra.mxu0 %v234
    %626 = vmatpush.msra.mxu0 %v230
    %627 = vmatpush.msra.mxu0 %v226
    %628 = vmatmul.f32.gmra.mxu0 %v192
    %v629 = vpop.f32.mrf.mxu0
    %v630 = vadd.f32 0.0, %v629
    %631 = vmatmul.f32.gmra.mxu0 %v194
    %v632 = vpop.f32.mrf.mxu0
    %v633 = vadd.f32 0.0, %v632
    %634 = vmatmul.f32.gmra.mxu0 %v196
    %v635 = vpop.f32.mrf.mxu0
    %v636 = vadd.f32 0.0, %v635
    %637 = vmatmul.f32.gmra.mxu0 %v198
    %v638 = vpop.f32.mrf.mxu0
    %v639 = vadd.f32 0.0, %v638
    %640 = vmatmul.f32.gmra.mxu0 %v200
    %v641 = vpop.f32.mrf.mxu0
    %v642 = vadd.f32 0.0, %v641
    %643 = vmatmul.f32.gmra.mxu0 %v202
    %v644 = vpop.f32.mrf.mxu0
    %v645 = vadd.f32 0.0, %v644
    %646 = vmatmul.f32.gmra.mxu0 %v204
    %v647 = vpop.f32.mrf.mxu0
    %v648 = vadd.f32 0.0, %v647
    %649 = vmatmul.f32.gmra.mxu0 %v206
    %v650 = vpop.f32.mrf.mxu0
    %v651 = vadd.f32 0.0, %v650
    %652 = vmatmul.f32.gmra.mxu0 %v208
    %v653 = vpop.f32.mrf.mxu0
    %v654 = vadd.f32 0.0, %v653
    %655 = vmatmul.f32.gmra.mxu0 %v210
    %v656 = vpop.f32.mrf.mxu0
    %v657 = vadd.f32 0.0, %v656
    %658 = vmatmul.f32.gmra.mxu0 %v212
    %v659 = vpop.f32.mrf.mxu0
    %v660 = vadd.f32 0.0, %v659
    %661 = vmatmul.f32.gmra.mxu0 %v214
    %v662 = vpop.f32.mrf.mxu0
    %v663 = vadd.f32 0.0, %v662
    %664 = vmatmul.f32.gmra.mxu0 %v216
    %v665 = vpop.f32.mrf.mxu0
    %v666 = vadd.f32 0.0, %v665
    %667 = vmatmul.f32.gmra.mxu0 %v218
    %v668 = vpop.f32.mrf.mxu0
    %v669 = vadd.f32 0.0, %v668
    %670 = vmatmul.f32.gmra.mxu0 %v220
    %v671 = vpop.f32.mrf.mxu0
    %v672 = vadd.f32 0.0, %v671
    %673 = vmatmul.f32.gmra.mxu0 %v222
    %v674 = vpop.f32.mrf.mxu0
    %v675 = vadd.f32 0.0, %v674
    %676 = vdwg.mxu0
    %677 = vmatpush.msra.mxu0 %v350
    %678 = vmatpush.msra.mxu0 %v346
    %679 = vmatpush.msra.mxu0 %v342
    %680 = vmatpush.msra.mxu0 %v338
    %681 = vmatpush.msra.mxu0 %v334
    %682 = vmatpush.msra.mxu0 %v330
    %683 = vmatpush.msra.mxu0 %v326
    %684 = vmatpush.msra.mxu0 %v322
    %685 = vmatpush.msra.mxu0 %v318
    %686 = vmatpush.msra.mxu0 %v314
    %687 = vmatpush.msra.mxu0 %v310
    %688 = vmatpush.msra.mxu0 %v306
    %689 = vmatpush.msra.mxu0 %v302
    %690 = vmatpush.msra.mxu0 %v298
    %691 = vmatpush.msra.mxu0 %v294
    %692 = vmatpush.msra.mxu0 %v290
    %693 = vmatmul.f32.gmra.mxu0 %v193
    %v694 = vpop.f32.mrf.mxu0
    %v695 = vadd.f32 %v630, %v694
    %696 = vmatmul.f32.gmra.mxu0 %v195
    %v697 = vpop.f32.mrf.mxu0
    %v698 = vadd.f32 %v633, %v697
    %699 = vmatmul.f32.gmra.mxu0 %v197
    %v700 = vpop.f32.mrf.mxu0
    %v701 = vadd.f32 %v636, %v700
    %702 = vmatmul.f32.gmra.mxu0 %v199
    %v703 = vpop.f32.mrf.mxu0
    %v704 = vadd.f32 %v639, %v703
    %705 = vmatmul.f32.gmra.mxu0 %v201
    %v706 = vpop.f32.mrf.mxu0
    %v707 = vadd.f32 %v642, %v706
    %708 = vmatmul.f32.gmra.mxu0 %v203
    %v709 = vpop.f32.mrf.mxu0
    %v710 = vadd.f32 %v645, %v709
    %711 = vmatmul.f32.gmra.mxu0 %v205
    %v712 = vpop.f32.mrf.mxu0
    %v713 = vadd.f32 %v648, %v712
    %714 = vmatmul.f32.gmra.mxu0 %v207
    %v715 = vpop.f32.mrf.mxu0
    %v716 = vadd.f32 %v651, %v715
    %717 = vmatmul.f32.gmra.mxu0 %v209
    %v718 = vpop.f32.mrf.mxu0
    %v719 = vadd.f32 %v654, %v718
    %720 = vmatmul.f32.gmra.mxu0 %v211
    %v721 = vpop.f32.mrf.mxu0
    %v722 = vadd.f32 %v657, %v721
    %723 = vmatmul.f32.gmra.mxu0 %v213
    %v724 = vpop.f32.mrf.mxu0
    %v725 = vadd.f32 %v660, %v724
    %726 = vmatmul.f32.gmra.mxu0 %v215
    %v727 = vpop.f32.mrf.mxu0
    %v728 = vadd.f32 %v663, %v727
    %729 = vmatmul.f32.gmra.mxu0 %v217
    %v730 = vpop.f32.mrf.mxu0
    %v731 = vadd.f32 %v666, %v730
    %732 = vmatmul.f32.gmra.mxu0 %v219
    %v733 = vpop.f32.mrf.mxu0
    %v734 = vadd.f32 %v669, %v733
    %735 = vmatmul.f32.gmra.mxu0 %v221
    %v736 = vpop.f32.mrf.mxu0
    %v737 = vadd.f32 %v672, %v736
    %738 = vmatmul.f32.gmra.mxu0 %v223
    %v739 = vpop.f32.mrf.mxu0
    %v740 = vadd.f32 %v675, %v739
    %741 = vdwg.mxu0
    %742 = vmatpush.msra.mxu0 %v287
    %743 = vmatpush.msra.mxu0 %v283
    %744 = vmatpush.msra.mxu0 %v279
    %745 = vmatpush.msra.mxu0 %v275
    %746 = vmatpush.msra.mxu0 %v271
    %747 = vmatpush.msra.mxu0 %v267
    %748 = vmatpush.msra.mxu0 %v263
    %749 = vmatpush.msra.mxu0 %v259
    %750 = vmatpush.msra.mxu0 %v255
    %751 = vmatpush.msra.mxu0 %v251
    %752 = vmatpush.msra.mxu0 %v247
    %753 = vmatpush.msra.mxu0 %v243
    %754 = vmatpush.msra.mxu0 %v239
    %755 = vmatpush.msra.mxu0 %v235
    %756 = vmatpush.msra.mxu0 %v231
    %757 = vmatpush.msra.mxu0 %v227
    %758 = vmatmul.f32.gmra.mxu0 %v192
    %v759 = vpop.f32.mrf.mxu0
    %v760 = vadd.f32 0.0, %v759
    %761 = vmatmul.f32.gmra.mxu0 %v194
    %v762 = vpop.f32.mrf.mxu0
    %v763 = vadd.f32 0.0, %v762
    %764 = vmatmul.f32.gmra.mxu0 %v196
    %v765 = vpop.f32.mrf.mxu0
    %v766 = vadd.f32 0.0, %v765
    %767 = vmatmul.f32.gmra.mxu0 %v198
    %v768 = vpop.f32.mrf.mxu0
    %v769 = vadd.f32 0.0, %v768
    %770 = vmatmul.f32.gmra.mxu0 %v200
    %v771 = vpop.f32.mrf.mxu0
    %v772 = vadd.f32 0.0, %v771
    %773 = vmatmul.f32.gmra.mxu0 %v202
    %v774 = vpop.f32.mrf.mxu0
    %v775 = vadd.f32 0.0, %v774
    %776 = vmatmul.f32.gmra.mxu0 %v204
    %v777 = vpop.f32.mrf.mxu0
    %v778 = vadd.f32 0.0, %v777
    %779 = vmatmul.f32.gmra.mxu0 %v206
    %v780 = vpop.f32.mrf.mxu0
    %v781 = vadd.f32 0.0, %v780
    %782 = vmatmul.f32.gmra.mxu0 %v208
    %v783 = vpop.f32.mrf.mxu0
    %v784 = vadd.f32 0.0, %v783
    %785 = vmatmul.f32.gmra.mxu0 %v210
    %v786 = vpop.f32.mrf.mxu0
    %v787 = vadd.f32 0.0, %v786
    %788 = vmatmul.f32.gmra.mxu0 %v212
    %v789 = vpop.f32.mrf.mxu0
    %v790 = vadd.f32 0.0, %v789
    %791 = vmatmul.f32.gmra.mxu0 %v214
    %v792 = vpop.f32.mrf.mxu0
    %v793 = vadd.f32 0.0, %v792
    %794 = vmatmul.f32.gmra.mxu0 %v216
    %v795 = vpop.f32.mrf.mxu0
    %v796 = vadd.f32 0.0, %v795
    %797 = vmatmul.f32.gmra.mxu0 %v218
    %v798 = vpop.f32.mrf.mxu0
    %v799 = vadd.f32 0.0, %v798
    %800 = vmatmul.f32.gmra.mxu0 %v220
    %v801 = vpop.f32.mrf.mxu0
    %v802 = vadd.f32 0.0, %v801
    %803 = vmatmul.f32.gmra.mxu0 %v222
    %v804 = vpop.f32.mrf.mxu0
    %v805 = vadd.f32 0.0, %v804
    %806 = vdwg.mxu0
    %807 = vmatpush.msra.mxu0 %v351
    %808 = vmatpush.msra.mxu0 %v347
    %809 = vmatpush.msra.mxu0 %v343
    %810 = vmatpush.msra.mxu0 %v339
    %811 = vmatpush.msra.mxu0 %v335
    %812 = vmatpush.msra.mxu0 %v331
    %813 = vmatpush.msra.mxu0 %v327
    %814 = vmatpush.msra.mxu0 %v323
    %815 = vmatpush.msra.mxu0 %v319
    %816 = vmatpush.msra.mxu0 %v315
    %817 = vmatpush.msra.mxu0 %v311
    %818 = vmatpush.msra.mxu0 %v307
    %819 = vmatpush.msra.mxu0 %v303
    %820 = vmatpush.msra.mxu0 %v299
    %821 = vmatpush.msra.mxu0 %v295
    %822 = vmatpush.msra.mxu0 %v291
    %823 = vmatmul.f32.gmra.mxu0 %v193
    %v824 = vpop.f32.mrf.mxu0
    %v825 = vadd.f32 %v760, %v824
    %826 = vmatmul.f32.gmra.mxu0 %v195
    %v827 = vpop.f32.mrf.mxu0
    %v828 = vadd.f32 %v763, %v827
    %829 = vmatmul.f32.gmra.mxu0 %v197
    %v830 = vpop.f32.mrf.mxu0
    %v831 = vadd.f32 %v766, %v830
    %832 = vmatmul.f32.gmra.mxu0 %v199
    %v833 = vpop.f32.mrf.mxu0
    %v834 = vadd.f32 %v769, %v833
    %835 = vmatmul.f32.gmra.mxu0 %v201
    %v836 = vpop.f32.mrf.mxu0
    %v837 = vadd.f32 %v772, %v836
    %838 = vmatmul.f32.gmra.mxu0 %v203
    %v839 = vpop.f32.mrf.mxu0
    %v840 = vadd.f32 %v775, %v839
    %841 = vmatmul.f32.gmra.mxu0 %v205
    %v842 = vpop.f32.mrf.mxu0
    %v843 = vadd.f32 %v778, %v842
    %844 = vmatmul.f32.gmra.mxu0 %v207
    %v845 = vpop.f32.mrf.mxu0
    %v846 = vadd.f32 %v781, %v845
    %847 = vmatmul.f32.gmra.mxu0 %v209
    %v848 = vpop.f32.mrf.mxu0
    %v849 = vadd.f32 %v784, %v848
    %850 = vmatmul.f32.gmra.mxu0 %v211
    %v851 = vpop.f32.mrf.mxu0
    %v852 = vadd.f32 %v787, %v851
    %853 = vmatmul.f32.gmra.mxu0 %v213
    %v854 = vpop.f32.mrf.mxu0
    %v855 = vadd.f32 %v790, %v854
    %856 = vmatmul.f32.gmra.mxu0 %v215
    %v857 = vpop.f32.mrf.mxu0
    %v858 = vadd.f32 %v793, %v857
    %859 = vmatmul.f32.gmra.mxu0 %v217
    %v860 = vpop.f32.mrf.mxu0
    %v861 = vadd.f32 %v796, %v860
    %862 = vmatmul.f32.gmra.mxu0 %v219
    %v863 = vpop.f32.mrf.mxu0
    %v864 = vadd.f32 %v799, %v863
    %865 = vmatmul.f32.gmra.mxu0 %v221
    %v866 = vpop.f32.mrf.mxu0
    %v867 = vadd.f32 %v802, %v866
    %868 = vmatmul.f32.gmra.mxu0 %v223
    %v869 = vpop.f32.mrf.mxu0
    %v870 = vadd.f32 %v805, %v869
    %871 = vdwg.mxu0
    %v872 = vadd.f32 %v128, %v435
    %v873 = vadd.f32 %v129, %v565
    %v874 = vadd.f32 %v130, %v695
    %v875 = vadd.f32 %v131, %v825
    %v876 = vadd.f32 %v132, %v438
    %v877 = vadd.f32 %v133, %v568
    %v878 = vadd.f32 %v134, %v698
    %v879 = vadd.f32 %v135, %v828
    %v880 = vadd.f32 %v136, %v441
    %v881 = vadd.f32 %v137, %v571
    %v882 = vadd.f32 %v138, %v701
    %v883 = vadd.f32 %v139, %v831
    %v884 = vadd.f32 %v140, %v444
    %v885 = vadd.f32 %v141, %v574
    %v886 = vadd.f32 %v142, %v704
    %v887 = vadd.f32 %v143, %v834
    %v888 = vadd.f32 %v144, %v447
    %v889 = vadd.f32 %v145, %v577
    %v890 = vadd.f32 %v146, %v707
    %v891 = vadd.f32 %v147, %v837
    %v892 = vadd.f32 %v148, %v450
    %v893 = vadd.f32 %v149, %v580
    %v894 = vadd.f32 %v150, %v710
    %v895 = vadd.f32 %v151, %v840
    %v896 = vadd.f32 %v152, %v453
    %v897 = vadd.f32 %v153, %v583
    %v898 = vadd.f32 %v154, %v713
    %v899 = vadd.f32 %v155, %v843
    %v900 = vadd.f32 %v156, %v456
    %v901 = vadd.f32 %v157, %v586
    %v902 = vadd.f32 %v158, %v716
    %v903 = vadd.f32 %v159, %v846
    %v904 = vadd.f32 %v160, %v459
    %v905 = vadd.f32 %v161, %v589
    %v906 = vadd.f32 %v162, %v719
    %v907 = vadd.f32 %v163, %v849
    %v908 = vadd.f32 %v164, %v462
    %v909 = vadd.f32 %v165, %v592
    %v910 = vadd.f32 %v166, %v722
    %v911 = vadd.f32 %v167, %v852
    %v912 = vadd.f32 %v168, %v465
    %v913 = vadd.f32 %v169, %v595
    %v914 = vadd.f32 %v170, %v725
    %v915 = vadd.f32 %v171, %v855
    %v916 = vadd.f32 %v172, %v468
    %v917 = vadd.f32 %v173, %v598
    %v918 = vadd.f32 %v174, %v728
    %v919 = vadd.f32 %v175, %v858
    %v920 = vadd.f32 %v176, %v471
    %v921 = vadd.f32 %v177, %v601
    %v922 = vadd.f32 %v178, %v731
    %v923 = vadd.f32 %v179, %v861
    %v924 = vadd.f32 %v180, %v474
    %v925 = vadd.f32 %v181, %v604
    %v926 = vadd.f32 %v182, %v734
    %v927 = vadd.f32 %v183, %v864
    %v928 = vadd.f32 %v184, %v477
    %v929 = vadd.f32 %v185, %v607
    %v930 = vadd.f32 %v186, %v737
    %v931 = vadd.f32 %v187, %v867
    %v932 = vadd.f32 %v188, %v480
    %v933 = vadd.f32 %v189, %v610
    %v934 = vadd.f32 %v190, %v740
    %v935 = vadd.f32 %v191, %v870
    %936 = vst [vmem:[#allocation8] sm:$0xff] %v872
    %937 = vst [vmem:[#allocation8 + $0x8] sm:$0xff] %v873
    %938 = vst [vmem:[#allocation8 + $0x10] sm:$0xff] %v874
    %939 = vst [vmem:[#allocation8 + $0x18] sm:$0xff] %v875
    %940 = vst [vmem:[#allocation8 + $0x20] sm:$0xff] %v876
    %941 = vst [vmem:[#allocation8 + $0x28] sm:$0xff] %v877
    %942 = vst [vmem:[#allocation8 + $0x30] sm:$0xff] %v878
    %943 = vst [vmem:[#allocation8 + $0x38] sm:$0xff] %v879
    %944 = vst [vmem:[#allocation8 + $0x40] sm:$0xff] %v880
    %945 = vst [vmem:[#allocation8 + $0x48] sm:$0xff] %v881
    %946 = vst [vmem:[#allocation8 + $0x50] sm:$0xff] %v882
    %947 = vst [vmem:[#allocation8 + $0x58] sm:$0xff] %v883
    %948 = vst [vmem:[#allocation8 + $0x60] sm:$0xff] %v884
    %949 = vst [vmem:[#allocation8 + $0x68] sm:$0xff] %v885
    %950 = vst [vmem:[#allocation8 + $0x70] sm:$0xff] %v886
    %951 = vst [vmem:[#allocation8 + $0x78] sm:$0xff] %v887
    %952 = vst [vmem:[#allocation8 + $0x80] sm:$0xff] %v888
    %953 = vst [vmem:[#allocation8 + $0x88] sm:$0xff] %v889
    %954 = vst [vmem:[#allocation8 + $0x90] sm:$0xff] %v890
    %955 = vst [vmem:[#allocation8 + $0x98] sm:$0xff] %v891
    %956 = vst [vmem:[#allocation8 + $0xa0] sm:$0xff] %v892
    %957 = vst [vmem:[#allocation8 + $0xa8] sm:$0xff] %v893
    %958 = vst [vmem:[#allocation8 + $0xb0] sm:$0xff] %v894
    %959 = vst [vmem:[#allocation8 + $0xb8] sm:$0xff] %v895
    %960 = vst [vmem:[#allocation8 + $0xc0] sm:$0xff] %v896
    %961 = vst [vmem:[#allocation8 + $0xc8] sm:$0xff] %v897
    %962 = vst [vmem:[#allocation8 + $0xd0] sm:$0xff] %v898
    %963 = vst [vmem:[#allocation8 + $0xd8] sm:$0xff] %v899
    %964 = vst [vmem:[#allocation8 + $0xe0] sm:$0xff] %v900
    %965 = vst [vmem:[#allocation8 + $0xe8] sm:$0xff] %v901
    %966 = vst [vmem:[#allocation8 + $0xf0] sm:$0xff] %v902
    %967 = vst [vmem:[#allocation8 + $0xf8] sm:$0xff] %v903
    %968 = vst [vmem:[#allocation8 + $0x100] sm:$0xff] %v904
    %969 = vst [vmem:[#allocation8 + $0x108] sm:$0xff] %v905
    %970 = vst [vmem:[#allocation8 + $0x110] sm:$0xff] %v906
    %971 = vst [vmem:[#allocation8 + $0x118] sm:$0xff] %v907
    %972 = vst [vmem:[#allocation8 + $0x120] sm:$0xff] %v908
    %973 = vst [vmem:[#allocation8 + $0x128] sm:$0xff] %v909
    %974 = vst [vmem:[#allocation8 + $0x130] sm:$0xff] %v910
    %975 = vst [vmem:[#allocation8 + $0x138] sm:$0xff] %v911
    %976 = vst [vmem:[#allocation8 + $0x140] sm:$0xff] %v912
    %977 = vst [vmem:[#allocation8 + $0x148] sm:$0xff] %v913
    %978 = vst [vmem:[#allocation8 + $0x150] sm:$0xff] %v914
    %979 = vst [vmem:[#allocation8 + $0x158] sm:$0xff] %v915
    %980 = vst [vmem:[#allocation8 + $0x160] sm:$0xff] %v916
    %981 = vst [vmem:[#allocation8 + $0x168] sm:$0xff] %v917
    %982 = vst [vmem:[#allocation8 + $0x170] sm:$0xff] %v918
    %983 = vst [vmem:[#allocation8 + $0x178] sm:$0xff] %v919
    %984 = vst [vmem:[#allocation8 + $0x180] sm:$0xff] %v920
    %985 = vst [vmem:[#allocation8 + $0x188] sm:$0xff] %v921
    %986 = vst [vmem:[#allocation8 + $0x190] sm:$0xff] %v922
    %987 = vst [vmem:[#allocation8 + $0x198] sm:$0xff] %v923
    %988 = vst [vmem:[#allocation8 + $0x1a0] sm:$0xff] %v924
    %989 = vst [vmem:[#allocation8 + $0x1a8] sm:$0xff] %v925
    %990 = vst [vmem:[#allocation8 + $0x1b0] sm:$0xff] %v926
    %991 = vst [vmem:[#allocation8 + $0x1b8] sm:$0xff] %v927
    %992 = vst [vmem:[#allocation8 + $0x1c0] sm:$0xff] %v928
    %993 = vst [vmem:[#allocation8 + $0x1c8] sm:$0xff] %v929
    %994 = vst [vmem:[#allocation8 + $0x1d0] sm:$0xff] %v930
    %995 = vst [vmem:[#allocation8 + $0x1d8] sm:$0xff] %v931
    %996 = vst [vmem:[#allocation8 + $0x1e0] sm:$0xff] %v932
    %997 = vst [vmem:[#allocation8 + $0x1e8] sm:$0xff] %v933
    %998 = vst [vmem:[#allocation8 + $0x1f0] sm:$0xff] %v934
    %999 = vst [vmem:[#allocation8 + $0x1f8] sm:$0xff] %v935
    // Predicated region
    $region30: #{tpu_custom_call.1} parent=1 // pred_check
      %p1000 = pneg %p60
    $region31: #{tpu_custom_call.1} parent=1 // pred_check_branch
      %1002 = sbr.rel (%p1000) target = $region33
    $region32: #{tpu_custom_call.1} parent=1 // pred_region
      %v1003 = vld [vmem:[#allocation8] sm:$0xff]
      %v1004 = vld [vmem:[#allocation8 + $0x8] sm:$0xff]
      %v1005 = vld [vmem:[#allocation8 + $0x10] sm:$0xff]
      %v1006 = vld [vmem:[#allocation8 + $0x18] sm:$0xff]
      %v1007 = vld [vmem:[#allocation8 + $0x20] sm:$0xff]
      %v1008 = vld [vmem:[#allocation8 + $0x28] sm:$0xff]
      %v1009 = vld [vmem:[#allocation8 + $0x30] sm:$0xff]
      %v1010 = vld [vmem:[#allocation8 + $0x38] sm:$0xff]
      %v1011 = vld [vmem:[#allocation8 + $0x40] sm:$0xff]
      %v1012 = vld [vmem:[#allocation8 + $0x48] sm:$0xff]
      %v1013 = vld [vmem:[#allocation8 + $0x50] sm:$0xff]
      %v1014 = vld [vmem:[#allocation8 + $0x58] sm:$0xff]
      %v1015 = vld [vmem:[#allocation8 + $0x60] sm:$0xff]
      %v1016 = vld [vmem:[#allocation8 + $0x68] sm:$0xff]
      %v1017 = vld [vmem:[#allocation8 + $0x70] sm:$0xff]
      %v1018 = vld [vmem:[#allocation8 + $0x78] sm:$0xff]
      %v1019 = vld [vmem:[#allocation8 + $0x80] sm:$0xff]
      %v1020 = vld [vmem:[#allocation8 + $0x88] sm:$0xff]
      %v1021 = vld [vmem:[#allocation8 + $0x90] sm:$0xff]
      %v1022 = vld [vmem:[#allocation8 + $0x98] sm:$0xff]
      %v1023 = vld [vmem:[#allocation8 + $0xa0] sm:$0xff]
      %v1024 = vld [vmem:[#allocation8 + $0xa8] sm:$0xff]
      %v1025 = vld [vmem:[#allocation8 + $0xb0] sm:$0xff]
      %v1026 = vld [vmem:[#allocation8 + $0xb8] sm:$0xff]
      %v1027 = vld [vmem:[#allocation8 + $0xc0] sm:$0xff]
      %v1028 = vld [vmem:[#allocation8 + $0xc8] sm:$0xff]
      %v1029 = vld [vmem:[#allocation8 + $0xd0] sm:$0xff]
      %v1030 = vld [vmem:[#allocation8 + $0xd8] sm:$0xff]
      %v1031 = vld [vmem:[#allocation8 + $0xe0] sm:$0xff]
      %v1032 = vld [vmem:[#allocation8 + $0xe8] sm:$0xff]
      %v1033 = vld [vmem:[#allocation8 + $0xf0] sm:$0xff]
      %v1034 = vld [vmem:[#allocation8 + $0xf8] sm:$0xff]
      %v1035 = vld [vmem:[#allocation8 + $0x100] sm:$0xff]
      %v1036 = vld [vmem:[#allocation8 + $0x108] sm:$0xff]
      %v1037 = vld [vmem:[#allocation8 + $0x110] sm:$0xff]
      %v1038 = vld [vmem:[#allocation8 + $0x118] sm:$0xff]
      %v1039 = vld [vmem:[#allocation8 + $0x120] sm:$0xff]
      %v1040 = vld [vmem:[#allocation8 + $0x128] sm:$0xff]
      %v1041 = vld [vmem:[#allocation8 + $0x130] sm:$0xff]
      %v1042 = vld [vmem:[#allocation8 + $0x138] sm:$0xff]
      %v1043 = vld [vmem:[#allocation8 + $0x140] sm:$0xff]
      %v1044 = vld [vmem:[#allocation8 + $0x148] sm:$0xff]
      %v1045 = vld [vmem:[#allocation8 + $0x150] sm:$0xff]
      %v1046 = vld [vmem:[#allocation8 + $0x158] sm:$0xff]
      %v1047 = vld [vmem:[#allocation8 + $0x160] sm:$0xff]
      %v1048 = vld [vmem:[#allocation8 + $0x168] sm:$0xff]
      %v1049 = vld [vmem:[#allocation8 + $0x170] sm:$0xff]
      %v1050 = vld [vmem:[#allocation8 + $0x178] sm:$0xff]
      %v1051 = vld [vmem:[#allocation8 + $0x180] sm:$0xff]
      %v1052 = vld [vmem:[#allocation8 + $0x188] sm:$0xff]
      %v1053 = vld [vmem:[#allocation8 + $0x190] sm:$0xff]
      %v1054 = vld [vmem:[#allocation8 + $0x198] sm:$0xff]
      %v1055 = vld [vmem:[#allocation8 + $0x1a0] sm:$0xff]
      %v1056 = vld [vmem:[#allocation8 + $0x1a8] sm:$0xff]
      %v1057 = vld [vmem:[#allocation8 + $0x1b0] sm:$0xff]
      %v1058 = vld [vmem:[#allocation8 + $0x1b8] sm:$0xff]
      %v1059 = vld [vmem:[#allocation8 + $0x1c0] sm:$0xff]
      %v1060 = vld [vmem:[#allocation8 + $0x1c8] sm:$0xff]
      %v1061 = vld [vmem:[#allocation8 + $0x1d0] sm:$0xff]
      %v1062 = vld [vmem:[#allocation8 + $0x1d8] sm:$0xff]
      %v1063 = vld [vmem:[#allocation8 + $0x1e0] sm:$0xff]
      %v1064 = vld [vmem:[#allocation8 + $0x1e8] sm:$0xff]
      %v1065 = vld [vmem:[#allocation8 + $0x1f0] sm:$0xff]
      %v1066 = vld [vmem:[#allocation8 + $0x1f8] sm:$0xff]
      %v1067 = vld [vmem:[#allocation7] sm:$0xf]
      %v1069 = vperm.slane %v1067, 0
      %v1070 = vperm.slane %v1067, 1
      %v1071 = vperm.slane %v1067, 2
      %v1072 = vperm.slane %v1067, 3
      %v1077 = vadd.f32 %v1003, %v1069
      %v1078 = vadd.f32 %v1004, %v1070
      %v1079 = vadd.f32 %v1005, %v1071
      %v1080 = vadd.f32 %v1006, %v1072
      %v1081 = vadd.f32 %v1007, %v1069
      %v1082 = vadd.f32 %v1008, %v1070
      %v1083 = vadd.f32 %v1009, %v1071
      %v1084 = vadd.f32 %v1010, %v1072
      %v1085 = vadd.f32 %v1011, %v1069
      %v1086 = vadd.f32 %v1012, %v1070
      %v1087 = vadd.f32 %v1013, %v1071
      %v1088 = vadd.f32 %v1014, %v1072
      %v1089 = vadd.f32 %v1015, %v1069
      %v1090 = vadd.f32 %v1016, %v1070
      %v1091 = vadd.f32 %v1017, %v1071
      %v1092 = vadd.f32 %v1018, %v1072
      %v1093 = vadd.f32 %v1019, %v1069
      %v1094 = vadd.f32 %v1020, %v1070
      %v1095 = vadd.f32 %v1021, %v1071
      %v1096 = vadd.f32 %v1022, %v1072
      %v1097 = vadd.f32 %v1023, %v1069
      %v1098 = vadd.f32 %v1024, %v1070
      %v1099 = vadd.f32 %v1025, %v1071
      %v1100 = vadd.f32 %v1026, %v1072
      %v1101 = vadd.f32 %v1027, %v1069
      %v1102 = vadd.f32 %v1028, %v1070
      %v1103 = vadd.f32 %v1029, %v1071
      %v1104 = vadd.f32 %v1030, %v1072
      %v1105 = vadd.f32 %v1031, %v1069
      %v1106 = vadd.f32 %v1032, %v1070
      %v1107 = vadd.f32 %v1033, %v1071
      %v1108 = vadd.f32 %v1034, %v1072
      %v1109 = vadd.f32 %v1035, %v1069
      %v1110 = vadd.f32 %v1036, %v1070
      %v1111 = vadd.f32 %v1037, %v1071
      %v1112 = vadd.f32 %v1038, %v1072
      %v1113 = vadd.f32 %v1039, %v1069
      %v1114 = vadd.f32 %v1040, %v1070
      %v1115 = vadd.f32 %v1041, %v1071
      %v1116 = vadd.f32 %v1042, %v1072
      %v1117 = vadd.f32 %v1043, %v1069
      %v1118 = vadd.f32 %v1044, %v1070
      %v1119 = vadd.f32 %v1045, %v1071
      %v1120 = vadd.f32 %v1046, %v1072
      %v1121 = vadd.f32 %v1047, %v1069
      %v1122 = vadd.f32 %v1048, %v1070
      %v1123 = vadd.f32 %v1049, %v1071
      %v1124 = vadd.f32 %v1050, %v1072
      %v1125 = vadd.f32 %v1051, %v1069
      %v1126 = vadd.f32 %v1052, %v1070
      %v1127 = vadd.f32 %v1053, %v1071
      %v1128 = vadd.f32 %v1054, %v1072
      %v1129 = vadd.f32 %v1055, %v1069
      %v1130 = vadd.f32 %v1056, %v1070
      %v1131 = vadd.f32 %v1057, %v1071
      %v1132 = vadd.f32 %v1058, %v1072
      %v1133 = vadd.f32 %v1059, %v1069
      %v1134 = vadd.f32 %v1060, %v1070
      %v1135 = vadd.f32 %v1061, %v1071
      %v1136 = vadd.f32 %v1062, %v1072
      %v1137 = vadd.f32 %v1063, %v1069
      %v1138 = vadd.f32 %v1064, %v1070
      %v1139 = vadd.f32 %v1065, %v1071
      %v1140 = vadd.f32 %v1066, %v1072
      %1141 = vst [vmem:[#allocation8] sm:$0xff] %v1077
      %1142 = vst [vmem:[#allocation8 + $0x8] sm:$0xff] %v1078
      %1143 = vst [vmem:[#allocation8 + $0x10] sm:$0xff] %v1079
      %1144 = vst [vmem:[#allocation8 + $0x18] sm:$0xff] %v1080
      %1145 = vst [vmem:[#allocation8 + $0x20] sm:$0xff] %v1081
      %1146 = vst [vmem:[#allocation8 + $0x28] sm:$0xff] %v1082
      %1147 = vst [vmem:[#allocation8 + $0x30] sm:$0xff] %v1083
      %1148 = vst [vmem:[#allocation8 + $0x38] sm:$0xff] %v1084
      %1149 = vst [vmem:[#allocation8 + $0x40] sm:$0xff] %v1085
      %1150 = vst [vmem:[#allocation8 + $0x48] sm:$0xff] %v1086
      %1151 = vst [vmem:[#allocation8 + $0x50] sm:$0xff] %v1087
      %1152 = vst [vmem:[#allocation8 + $0x58] sm:$0xff] %v1088
      %1153 = vst [vmem:[#allocation8 + $0x60] sm:$0xff] %v1089
      %1154 = vst [vmem:[#allocation8 + $0x68] sm:$0xff] %v1090
      %1155 = vst [vmem:[#allocation8 + $0x70] sm:$0xff] %v1091
      %1156 = vst [vmem:[#allocation8 + $0x78] sm:$0xff] %v1092
      %1157 = vst [vmem:[#allocation8 + $0x80] sm:$0xff] %v1093
      %1158 = vst [vmem:[#allocation8 + $0x88] sm:$0xff] %v1094
      %1159 = vst [vmem:[#allocation8 + $0x90] sm:$0xff] %v1095
      %1160 = vst [vmem:[#allocation8 + $0x98] sm:$0xff] %v1096
      %1161 = vst [vmem:[#allocation8 + $0xa0] sm:$0xff] %v1097
      %1162 = vst [vmem:[#allocation8 + $0xa8] sm:$0xff] %v1098
      %1163 = vst [vmem:[#allocation8 + $0xb0] sm:$0xff] %v1099
      %1164 = vst [vmem:[#allocation8 + $0xb8] sm:$0xff] %v1100
      %1165 = vst [vmem:[#allocation8 + $0xc0] sm:$0xff] %v1101
      %1166 = vst [vmem:[#allocation8 + $0xc8] sm:$0xff] %v1102
      %1167 = vst [vmem:[#allocation8 + $0xd0] sm:$0xff] %v1103
      %1168 = vst [vmem:[#allocation8 + $0xd8] sm:$0xff] %v1104
      %1169 = vst [vmem:[#allocation8 + $0xe0] sm:$0xff] %v1105
      %1170 = vst [vmem:[#allocation8 + $0xe8] sm:$0xff] %v1106
      %1171 = vst [vmem:[#allocation8 + $0xf0] sm:$0xff] %v1107
      %1172 = vst [vmem:[#allocation8 + $0xf8] sm:$0xff] %v1108
      %1173 = vst [vmem:[#allocation8 + $0x100] sm:$0xff] %v1109
      %1174 = vst [vmem:[#allocation8 + $0x108] sm:$0xff] %v1110
      %1175 = vst [vmem:[#allocation8 + $0x110] sm:$0xff] %v1111
      %1176 = vst [vmem:[#allocation8 + $0x118] sm:$0xff] %v1112
      %1177 = vst [vmem:[#allocation8 + $0x120] sm:$0xff] %v1113
      %1178 = vst [vmem:[#allocation8 + $0x128] sm:$0xff] %v1114
      %1179 = vst [vmem:[#allocation8 + $0x130] sm:$0xff] %v1115
      %1180 = vst [vmem:[#allocation8 + $0x138] sm:$0xff] %v1116
      %1181 = vst [vmem:[#allocation8 + $0x140] sm:$0xff] %v1117
      %1182 = vst [vmem:[#allocation8 + $0x148] sm:$0xff] %v1118
      %1183 = vst [vmem:[#allocation8 + $0x150] sm:$0xff] %v1119
      %1184 = vst [vmem:[#allocation8 + $0x158] sm:$0xff] %v1120
      %1185 = vst [vmem:[#allocation8 + $0x160] sm:$0xff] %v1121
      %1186 = vst [vmem:[#allocation8 + $0x168] sm:$0xff] %v1122
      %1187 = vst [vmem:[#allocation8 + $0x170] sm:$0xff] %v1123
      %1188 = vst [vmem:[#allocation8 + $0x178] sm:$0xff] %v1124
      %1189 = vst [vmem:[#allocation8 + $0x180] sm:$0xff] %v1125
      %1190 = vst [vmem:[#allocation8 + $0x188] sm:$0xff] %v1126
      %1191 = vst [vmem:[#allocation8 + $0x190] sm:$0xff] %v1127
      %1192 = vst [vmem:[#allocation8 + $0x198] sm:$0xff] %v1128
      %1193 = vst [vmem:[#allocation8 + $0x1a0] sm:$0xff] %v1129
      %1194 = vst [vmem:[#allocation8 + $0x1a8] sm:$0xff] %v1130
      %1195 = vst [vmem:[#allocation8 + $0x1b0] sm:$0xff] %v1131
      %1196 = vst [vmem:[#allocation8 + $0x1b8] sm:$0xff] %v1132
      %1197 = vst [vmem:[#allocation8 + $0x1c0] sm:$0xff] %v1133
      %1198 = vst [vmem:[#allocation8 + $0x1c8] sm:$0xff] %v1134
      %1199 = vst [vmem:[#allocation8 + $0x1d0] sm:$0xff] %v1135
      %1200 = vst [vmem:[#allocation8 + $0x1d8] sm:$0xff] %v1136
      %1201 = vst [vmem:[#allocation8 + $0x1e0] sm:$0xff] %v1137
      %1202 = vst [vmem:[#allocation8 + $0x1e8] sm:$0xff] %v1138
      %1203 = vst [vmem:[#allocation8 + $0x1f0] sm:$0xff] %v1139
      %1204 = vst [vmem:[#allocation8 + $0x1f8] sm:$0xff] %v1140
    $region33: #{tpu_custom_call.1} parent=1 // pred_fallthru
      _
    // Predicated region
    $region34: #{tpu_custom_call.1} parent=1 // pred_check
      _
    $region35: #{tpu_custom_call.1} parent=1 // pred_check_branch
      %1206 = sbr.rel (0) target = $region37
    $region36: #{tpu_custom_call.1} parent=1 // pred_region
      %1208 = vsyncadd [#allocation4], 0
      %s1209 = sshll.u32 [#allocation8], 4
      %s1210 = int_to_ptr.vmem [resolvable:$true] %s1209
      %s1211 = sshll.u32 %s3, 4
      %s1212 = int_to_ptr.hbm [resolvable:$true] %s1211
      %1217 = dma.vmem_to_hbm [thread:$0]  %s1210, 8192, %s1212, [#allocation4], 512, 512, 32
    $region37: #{tpu_custom_call.1} parent=1 // pred_fallthru
      _
    // Predicated region
    $region38: #{tpu_custom_call.1} parent=1 // pred_check
      _
    $region39: #{tpu_custom_call.1} parent=1 // pred_check_branch
      %1219 = sbr.rel (0) target = $region41
    $region40: #{tpu_custom_call.1} parent=1 // pred_region
      %1221 = dma.done [#allocation4], 8192
    $region41: #{tpu_custom_call.1} parent=1 // pred_fallthru
      _
    %1222 = vsyncpa [#allocation3], 1
    %1223 = vsyncpa [#allocation6], 1
    %1224 = vsyncpa [#allocation4], 1

</llo_original>
